<compile_context>
chip_gen: v7x
topology: tpu7x:2x2x1
jax: 0.10.0
libtpu: 0.0.40
codegen_flags: <defaults>
</compile_context>

<pallas_src>
import jax
import jax.numpy as jnp
from jax.experimental import pallas as pl
from jax.experimental.pallas import tpu as pltpu


_TILE_BYTES = 4 << 20        # ~4 MiB per tile (per-buffer), good on v5e/v6e/v7x
_VMEM_LIMIT = 40 << 20       # explicit scoped-VMEM limit; < 64 MiB (v7x physical)
_LANE_CHOICES = (1024, 512, 256, 128)   # lane-dense widths (multiples of 128)


def _copy_kernel(x_ref, o_ref):
    # The abstract forward defines no compute; a concrete subclass replaces
    # this body with its real math.
    o_ref[...] = x_ref[...]


def _round_up(n, m):
    return ((n + m - 1) // m) * m


def dynamic_module_forward_pallas(x):
    """Lane-dense Pallas pass-through template for the abstract DynamicModule.

    # TODO(synk): forward() is abstract in the PyTorch module (raises
    # NotImplementedError); a concrete subclass would replace the identity
    # body in `_copy_kernel` with its real compute.
    """
    orig_shape = x.shape
    size = x.size
    itemsize = x.dtype.itemsize

    # Packed-sublane minimum for the row tile: 8 (f32), 16 (bf16), 32 (int8).
    sublane_min = max(8, 32 // itemsize)

    # Cheap mem-bound hint for XLA's scheduler (pure copy: read + write).
    cost = pl.CostEstimate(
        flops=0, transcendentals=0, bytes_accessed=2 * size * itemsize
    )

    # Pick the widest lane-dense width that divides the flat size so the
    # reshape is a pure view (no pad, no extra HBM traffic).
    lanes = next((w for w in _LANE_CHOICES if size % w == 0), None)

    if lanes is None:
        # Rare ragged fallback: whole array as a single VMEM block.
        # TODO(synk): for very large ragged tensors this should become a tiled
        # kernel with a masked tail store instead of one whole-array block.
        flat2d = x.reshape(1, size)
        out = pl.pallas_call(
            _copy_kernel,
            out_shape=jax.ShapeDtypeStruct(flat2d.shape, flat2d.dtype),
            compiler_params=pltpu.CompilerParams(vmem_limit_bytes=_VMEM_LIMIT),
            cost_estimate=cost,
        )(flat2d)
        return out.reshape(orig_shape)

    rows = size // lanes
    x2d = x.reshape(rows, lanes)   # pure reshape, no data movement

    # Row tile: ~_TILE_BYTES per buffer, rounded down to the sublane minimum.
    cap = max(
        sublane_min,
        (_TILE_BYTES // (lanes * itemsize)) // sublane_min * sublane_min,
    )
    row_tile = min(cap, rows)
    grid_steps = pl.cdiv(rows, row_tile)

    # v7x megacore: ensure >=2 grid steps when the tensor is big enough, so
    # the "parallel" axis actually shards across both TensorCores.
    if grid_steps < 2 and rows >= 2 * sublane_min:
        row_tile = _round_up((rows + 1) // 2, sublane_min)
        grid_steps = pl.cdiv(rows, row_tile)

    # row_tile is either a multiple of sublane_min (>=8) or equals the full
    # row extent, so the (8, 128) block constraint is always satisfied and
    # every store is a full, unmasked 128-lane op.  A ragged final grid step
    # (rows % row_tile != 0) is handled by Pallas's boundary masking — no
    # padded HBM buffer is ever materialized.
    out2d = pl.pallas_call(
        _copy_kernel,
        out_shape=jax.ShapeDtypeStruct(x2d.shape, x2d.dtype),
        grid=(grid_steps,),
        in_specs=[pl.BlockSpec((row_tile, lanes), lambda i: (i, 0))],
        out_specs=pl.BlockSpec((row_tile, lanes), lambda i: (i, 0)),
        compiler_params=pltpu.CompilerParams(
            dimension_semantics=("parallel",),
            vmem_limit_bytes=_VMEM_LIMIT,
        ),
        cost_estimate=cost,
    )(x2d)

    return out2d.reshape(orig_shape)


class DynamicModuleJAX:
    """JAX-side mirror of the abstract PyTorch DynamicModule."""

    def __init__(self):
        self.has_internal_state = False  # matches PyTorch __init__

    def get_requested_input(self, requested_output="internal"):
        # TODO(synk): abstract in the reference module (NotImplementedError).
        raise NotImplementedError

    def forward(self, x):
        # Base class defines no compute: the fastest correct "kernel" is no
        # kernel at all (0 HBM bytes).  Subclasses with real compute would
        # call a kernel built from the template above.
        return x

    def init_hidden(self, batch_size, device=None):
        if self.has_internal_state:
            # TODO(synk): abstract in the reference module for stateful subclasses.
            raise NotImplementedError
        return None


if __name__ == "__main__":
    key = jax.random.PRNGKey(0)
    # Small NCHW-shaped example input consistent with a conv-style subclass.
    x = jax.random.normal(key, (2, 4, 16, 16), dtype=jnp.float32)

    mod = DynamicModuleJAX()
    mod.init_hidden(batch_size=2)            # no-op: has_internal_state == False

    # Zero-cost base-class forward (no kernel launch).
    y_fast = mod.forward(x)
    assert y_fast is x

    # Pallas kernel template (lane-dense copy, no wrapper-side pad/slice).
    y = dynamic_module_forward_pallas(x)
    y = jax.block_until_ready(y)

    assert y.shape == x.shape and y.dtype == x.dtype
    assert bool(jnp.all(y == x))              # pass-through semantics
    print("KERNEL_OK")
</pallas_src>

<mosaic_0001>
module attributes {stable_mosaic.version = 11 : i64} {
  func.func @_copy_kernel(%arg0: i32, %arg1: memref<2x1024xf32, #tpu.memory_space<vmem>>, %arg2: memref<2x1024xf32, #tpu.memory_space<vmem>>) attributes {dimension_semantics = [#tpu.dimension_semantics<parallel>], iteration_bounds = array<i64: 1>, scalar_prefetch = 0 : i64, scratch_operands = 0 : i64, tpu.core_type = #tpu.core_type<tc>, window_params = [{transform_indices = @transform_0, window_bounds = array<i64: 2, 1024>}, {transform_indices = @transform_1, window_bounds = array<i64: 2, 1024>}]} {
    %c0 = arith.constant 0 : index
    %c0_0 = arith.constant 0 : index
    %0 = vector.load %arg1[%c0, %c0_0] : memref<2x1024xf32, #tpu.memory_space<vmem>>, vector<2x1024xf32>
    %c0_1 = arith.constant 0 : index
    %c0_2 = arith.constant 0 : index
    %1 = vector.load %arg2[%c0_1, %c0_2] : memref<2x1024xf32, #tpu.memory_space<vmem>>, vector<2x1024xf32>
    tpu.vector_store %arg2[%c0_1, %c0_2], %0 {strides = array<i32>} : memref<2x1024xf32, #tpu.memory_space<vmem>>, vector<2x1024xf32>,
    return
  }
  func.func @transform_0(%arg0: i32) -> (i32, i32) {
    %c0_i32 = arith.constant 0 : i32
    %c0_i32_0 = arith.constant 0 : i32
    return %arg0, %c0_i32 : i32, i32
  }
  func.func @transform_1(%arg0: i32) -> (i32, i32) {
    %c0_i32 = arith.constant 0 : i32
    %c0_i32_0 = arith.constant 0 : i32
    return %arg0, %c0_i32 : i32, i32
  }
}

</mosaic_0001>

<llo_original>
// kernel: tpu_custom_call.1
$region0: #{tpu_custom_call.1}
  #allocation0 [shape = 'u32[]', space=smem, size = 0x4, offset = 0x4, fixed_abs, tag = 'smem constant byte address 0x4 - core index']
  #allocation1 [shape = 'u32[144,128]{1,0:T(1,128)}', space=vmem, size = 0x12000, scoped, tag = 'internal scratch']
  %s0 = inlined_call_operand.hbm [shape: f32[2,1024], index: 0, kind: input, shape index: {}]
  %s1 = inlined_call_operand.hbm [shape: f32[2,1024], index: 1, kind: output, shape index: {}]
  %s2 = sld [smem:[#allocation0]]
  $region18: #{tpu_custom_call.1} parent=0
    _
  %s4 = ssub.s32 1, %s2
  %s5 = scalar_select 0, %s4, %s2
  $region1: #{tpu_custom_call.1} parent=0
    #allocation2 [shape = 'u8[8192]{0}', space=vmem, size = 0x2000, scoped, tag = 'input window, operand 0, single buffered']
    #allocation3 [shape = 's32[1]{0}', space=sflag, size = 0x4, scoped, tag = 'scoped memory for tpu_custom_call.1']
    #allocation4 [shape = 's32[1]{0}', space=sflag, size = 0x4, scoped, tag = 'scoped memory for tpu_custom_call.1']
    #allocation5 [shape = 'u8[8192]{0}', space=vmem, size = 0x2000, scoped, tag = 'output window, operand 0, single buffered']
    %6 = vsyncpa [#allocation3], 0
    %7 = vsyncpa [#allocation4], 0
    // Predicated region
    $region2: #{tpu_custom_call.1} parent=1 // pred_check
      _
    $region3: #{tpu_custom_call.1} parent=1 // pred_check_branch
      %9 = sbr.rel (0) target = $region5
    $region4: #{tpu_custom_call.1} parent=1 // pred_region
      %s11 = ssub.s32 256, 256
      %12 = vsyncadd [#allocation3], %s11
      %s14 = sshll.u32 [#allocation2], 4
      %s15 = int_to_ptr.vmem [resolvable:$true] %s14
      %17 = dma.hbm_to_vmem [thread:$0]  %s0, 256, %s15, [#allocation3]
    $region5: #{tpu_custom_call.1} parent=1 // pred_fallthru
      _
    // Predicated region
    $region6: #{tpu_custom_call.1} parent=1 // pred_check
      _
    $region7: #{tpu_custom_call.1} parent=1 // pred_check_branch
      %19 = sbr.rel (0) target = $region9
    $region8: #{tpu_custom_call.1} parent=1 // pred_region
      %20 = dma.done [#allocation3], 256
    $region9: #{tpu_custom_call.1} parent=1 // pred_fallthru
      _
    %v21 = vld [vmem:[#allocation2] sm:$0xff]
    %v22 = vld [vmem:[#allocation2 + $0x8] sm:$0xff]
    %23 = vst [vmem:[#allocation5] sm:$0xff] %v21
    %24 = vst [vmem:[#allocation5 + $0x8] sm:$0xff] %v22
    // Predicated region
    $region10: #{tpu_custom_call.1} parent=1 // pred_check
      _
    $region11: #{tpu_custom_call.1} parent=1 // pred_check_branch
      %26 = sbr.rel (0) target = $region13
    $region12: #{tpu_custom_call.1} parent=1 // pred_region
      %s28 = ssub.s32 256, 256
      %29 = vsyncadd [#allocation4], %s28
      %s31 = sshll.u32 [#allocation5], 4
      %s32 = int_to_ptr.vmem [resolvable:$true] %s31
      %34 = dma.vmem_to_hbm [thread:$0]  %s32, 256, %s1, [#allocation4]
    $region13: #{tpu_custom_call.1} parent=1 // pred_fallthru
      _
    // Predicated region
    $region14: #{tpu_custom_call.1} parent=1 // pred_check
      _
    $region15: #{tpu_custom_call.1} parent=1 // pred_check_branch
      %36 = sbr.rel (0) target = $region17
    $region16: #{tpu_custom_call.1} parent=1 // pred_region
      %37 = dma.done [#allocation4], 256
    $region17: #{tpu_custom_call.1} parent=1 // pred_fallthru
      _
    %38 = vsyncpa [#allocation3], 1
    %39 = vsyncpa [#allocation4], 1

</llo_original>
